<compile_context>
chip_gen: v6e
topology: v6e:2x2x1
jax: 0.10.0
libtpu: 0.0.40
codegen_flags: <defaults>
</compile_context>

<pallas_src>
import functools
import math

import jax
import jax.numpy as jnp
from jax.experimental import pallas as pl
from jax.experimental.pallas import tpu as pltpu


def _label_smoothing_kernel(x_ref, tgt_ref, out_ref, *, n_rows, tile_n,
                            padding_idx, confidence, smooth_val, c_row):
    i = pl.program_id(0)

    x = x_ref[...].astype(jnp.float32)            # (TN, V)  log-probabilities
    tgt = tgt_ref[...]                            # (TN, 1)  int32 class indices

    # Single fused per-row mask: row is inside [0, n_rows) AND its target is
    # not the padding index (index_fill_ on dim 0).  OOB tail rows contain
    # unspecified data; the final per-row select discards any NaN/Inf from
    # them, so no full-tile sanitize is needed.
    row = jax.lax.broadcasted_iota(jnp.int32, (x.shape[0], 1), 0)
    row_ok = ((i * tile_n + row) < n_rows) & (tgt != padding_idx)    # (TN, 1)

    # Per-element weight: -confidence on the target column, -smooth elsewhere.
    #   sum_j w_j * x[i,j] = -conf*x[i,tgt] - smooth*(rowsum_i - x[i,tgt])
    col = jax.lax.broadcasted_iota(jnp.int32, x.shape, 1)
    w = jnp.where(col == tgt, -confidence, -smooth_val)              # (TN, V)
    s = jnp.sum(w * x, axis=1, keepdims=True)                        # (TN, 1)

    # Padding-column correction: the pad column must contribute 0, but s
    # charged it -smooth * x[:, pad].  Per-row (1 lane) work only.
    x_pad = x[:, padding_idx:padding_idx + 1]                        # (TN, 1)

    per_row = c_row + s + smooth_val * x_pad                         # (TN, 1)
    per_row = jnp.where(row_ok, per_row, 0.0)   # select: drops OOB NaN/Inf too

    # One partial sum per tile; tiles are independent -> "parallel" grid axis.
    out_ref[0, 0] = jnp.sum(per_row)


def _round_up(v, m):
    return (v + m - 1) // m * m


def _sublane_multiple(itemsize):
    # f32 -> 8 sublanes, bf16 -> 16 (packed), int8/fp8 -> 32.
    return max(8, 32 // max(int(itemsize), 1))


def _pick_tile_n(n_rows, v, itemsize, *, target_block_bytes=8 * 1024 * 1024):
    """Largest row tile (sublane-aligned) whose (tile_n, V) block fits the budget."""
    align = _sublane_multiple(itemsize)
    rows_by_budget = max(align,
                         (target_block_bytes // max(v * itemsize, 1)) // align * align)
    rows_needed = _round_up(max(n_rows, 1), align)
    return int(min(rows_by_budget, rows_needed))


def label_smoothing_loss(x, target, *, size, padding_idx, smoothing, tile_n=None):
    """x: [N, V] float log-probs (f32/bf16), target: [N] int. Returns scalar f32 loss."""
    N, V = x.shape
    assert V == size

    itemsize = jnp.dtype(x.dtype).itemsize
    align = _sublane_multiple(itemsize)
    if tile_n is None:
        tile_n = _pick_tile_n(N, V, itemsize)
    tile_n = max(align, int(tile_n))
    assert tile_n % align == 0, "row tile must be a multiple of the sublane packing"
    num_tiles = pl.cdiv(N, tile_n)

    confidence = 1.0 - smoothing
    smooth_val = smoothing / (size - 2)
    # Trace-time log constants (guarded so a zero branch contributes exactly 0,
    # matching the 0*log(0) := 0 convention of KL divergence).
    log_conf = math.log(confidence) if confidence > 0.0 else 0.0
    log_smooth = math.log(smooth_val) if smooth_val > 0.0 else 0.0
    # Constant part of the per-row loss for a valid, non-padding-target row:
    #   conf*log(conf) + (V-2) * smooth*log(smooth)
    c_row = confidence * log_conf + smooth_val * log_smooth * (size - 2)

    tgt2d = target.astype(jnp.int32).reshape(N, 1)

    kernel = functools.partial(
        _label_smoothing_kernel,
        n_rows=N, tile_n=tile_n, padding_idx=int(padding_idx),
        confidence=float(confidence), smooth_val=float(smooth_val),
        c_row=float(c_row))

    # Right-size the VMEM limit: 2x (double-buffered) input blocks + headroom.
    x_block_bytes = tile_n * V * itemsize
    tgt_block_bytes = tile_n * 4
    vmem_limit = int(min(max(2 * (x_block_bytes + tgt_block_bytes) + (4 << 20),
                             16 << 20),
                         48 << 20))

    partials = pl.pallas_call(
        kernel,
        out_shape=jax.ShapeDtypeStruct((num_tiles, 1), jnp.float32),
        grid_spec=pltpu.PrefetchScalarGridSpec(
            num_scalar_prefetch=0,
            grid=(num_tiles,),
            in_specs=[
                pl.BlockSpec((tile_n, V), lambda i: (i, 0)),
                pl.BlockSpec((tile_n, 1), lambda i: (i, 0)),
            ],
            out_specs=pl.BlockSpec((1, 1), lambda i: (i, 0),
                                   memory_space=pltpu.SMEM),
        ),
        compiler_params=pltpu.CompilerParams(
            dimension_semantics=("parallel",),      # independent tiles (megacore)
            vmem_limit_bytes=vmem_limit),
    )(x, tgt2d)

    # Tiny final reduction over per-tile partials (num_tiles scalars).
    return jnp.sum(partials)


def _reference_loss(x, target, *, size, padding_idx, smoothing):
    """Pure-JAX reference mirroring the PyTorch forward."""
    confidence = 1.0 - smoothing
    N, V = x.shape
    col = jnp.arange(V)[None, :]
    tgt = target[:, None]
    td = jnp.full((N, V), smoothing / (size - 2), jnp.float32)
    td = jnp.where(col == tgt, confidence, td)
    td = jnp.where(col == padding_idx, 0.0, td)
    td = jnp.where(tgt == padding_idx, 0.0, td)
    return jnp.sum(jnp.where(td > 0.0, td * (jnp.log(td) - x.astype(jnp.float32)), 0.0))


if __name__ == "__main__":
    SIZE = 32          # vocab / class count
    PADDING_IDX = 0
    SMOOTHING = 0.4
    N = 20             # deliberately not a multiple of 8 to exercise ragged tiles

    key = jax.random.PRNGKey(0)
    kx, kt = jax.random.split(key)
    logits = jax.random.normal(kx, (N, SIZE), dtype=jnp.float32)
    x = jax.nn.log_softmax(logits, axis=-1)      # log-probs, like KLDivLoss input
    target = jax.random.randint(kt, (N,), 0, SIZE, dtype=jnp.int32)
    # make a few rows padding to exercise the index_fill_ path
    target = target.at[3].set(PADDING_IDX).at[7].set(PADDING_IDX)

    ref = _reference_loss(
        x, target, size=SIZE, padding_idx=PADDING_IDX, smoothing=SMOOTHING)

    # 1) auto tile_n (single ragged tile covering all rows), f32 input
    loss_auto = label_smoothing_loss(
        x, target, size=SIZE, padding_idx=PADDING_IDX, smoothing=SMOOTHING)
    loss_auto = jax.block_until_ready(loss_auto)
    assert jnp.allclose(loss_auto, ref, rtol=1e-5, atol=1e-5), (loss_auto, ref)

    # 2) forced small tile_n (multi-tile grid + ragged tail tile)
    loss_tiled = label_smoothing_loss(
        x, target, size=SIZE, padding_idx=PADDING_IDX, smoothing=SMOOTHING,
        tile_n=8)
    loss_tiled = jax.block_until_ready(loss_tiled)
    assert jnp.allclose(loss_tiled, ref, rtol=1e-5, atol=1e-5), (loss_tiled, ref)

    # 3) bf16 log-probs (halved HBM traffic); kernel accumulates in f32
    x_bf16 = x.astype(jnp.bfloat16)
    ref_bf16 = _reference_loss(
        x_bf16, target, size=SIZE, padding_idx=PADDING_IDX, smoothing=SMOOTHING)
    loss_bf16 = label_smoothing_loss(
        x_bf16, target, size=SIZE, padding_idx=PADDING_IDX, smoothing=SMOOTHING)
    loss_bf16 = jax.block_until_ready(loss_bf16)
    assert jnp.allclose(loss_bf16, ref_bf16, rtol=1e-3, atol=1e-3), (loss_bf16, ref_bf16)

    print("KERNEL_OK")
</pallas_src>

<mosaic_0001>
module attributes {stable_mosaic.version = 11 : i64} {
  func.func @_label_smoothing_kernel(%arg0: i32, %arg1: memref<24x32xf32, #tpu.memory_space<vmem>>, %arg2: memref<24x1xi32, #tpu.memory_space<vmem>>, %arg3: memref<1x1xf32, #tpu.memory_space<smem>>) attributes {dimension_semantics = [#tpu.dimension_semantics<parallel>], iteration_bounds = array<i64: 1>, scalar_prefetch = 0 : i64, scratch_operands = 0 : i64, tpu.core_type = #tpu.core_type<tc>, window_params = [{transform_indices = @transform_0, window_bounds = array<i64: 24, 32>}, {transform_indices = @transform_1, window_bounds = array<i64: 24, 1>}, {transform_indices = @transform_2, window_bounds = array<i64: 1, 1>}]} {
    %c0 = arith.constant 0 : index
    %c0_0 = arith.constant 0 : index
    %0 = vector.load %arg1[%c0, %c0_0] : memref<24x32xf32, #tpu.memory_space<vmem>>, vector<24x32xf32>
    %c0_1 = arith.constant 0 : index
    %c0_2 = arith.constant 0 : index
    %1 = vector.load %arg2[%c0_1, %c0_2] : memref<24x1xi32, #tpu.memory_space<vmem>>, vector<24x1xi32>
    %2 = tpu.iota {dimensions = array<i32: 0>} : vector<24x1xi32>
    %c24_i32 = arith.constant 24 : i32
    %3 = arith.muli %arg0, %c24_i32 : i32
    %4 = vector.broadcast %3 : i32 to vector<24x1xi32>
    %5 = arith.addi %4, %2 : vector<24x1xi32>
    %c20_i32 = arith.constant 20 : i32
    %6 = vector.broadcast %c20_i32 : i32 to vector<24x1xi32>
    %7 = arith.cmpi slt, %5, %6 : vector<24x1xi32>
    %c0_i32 = arith.constant 0 : i32
    %8 = vector.broadcast %c0_i32 : i32 to vector<24x1xi32>
    %9 = arith.cmpi ne, %1, %8 : vector<24x1xi32>
    %10 = arith.andi %7, %9 : vector<24x1xi1>
    %11 = tpu.iota {dimensions = array<i32: 1>} : vector<24x32xi32>
    %12 = vector.broadcast %1 : vector<24x1xi32> to vector<24x32xi32>
    %13 = arith.cmpi eq, %11, %12 : vector<24x32xi32>
    %cst = arith.constant -6.000000e-01 : f32
    %cst_3 = arith.constant -0.0133333337 : f32
    %14 = vector.broadcast %cst : f32 to vector<24x32xf32>
    %15 = vector.broadcast %cst_3 : f32 to vector<24x32xf32>
    %16 = arith.select %13, %14, %15 : vector<24x32xi1>, vector<24x32xf32>
    %17 = arith.mulf %16, %0 : vector<24x32xf32>
    %cst_4 = arith.constant dense<0.000000e+00> : vector<24xf32>
    %18 = vector.multi_reduction <add>, %17, %cst_4 [1] : vector<24x32xf32> to vector<24xf32>
    %19 = vector.shape_cast %18 : vector<24xf32> to vector<24x1xf32>
    %20 = vector.extract_strided_slice %0 {offsets = [0, 0], sizes = [24, 1], strides = [1, 1]} : vector<24x32xf32> to vector<24x1xf32>
    %cst_5 = arith.constant -2.03349066 : f32
    %21 = vector.broadcast %cst_5 : f32 to vector<24x1xf32>
    %22 = arith.addf %21, %19 : vector<24x1xf32>
    %cst_6 = arith.constant 0.0133333337 : f32
    %23 = vector.broadcast %cst_6 : f32 to vector<24x1xf32>
    %24 = arith.mulf %23, %20 : vector<24x1xf32>
    %25 = arith.addf %22, %24 : vector<24x1xf32>
    %cst_7 = arith.constant 0.000000e+00 : f32
    %26 = vector.broadcast %cst_7 : f32 to vector<24x1xf32>
    %27 = arith.select %10, %25, %26 : vector<24x1xi1>, vector<24x1xf32>
    %28 = vector.shape_cast %27 : vector<24x1xf32> to vector<1x24x1xf32>
    %cst_8 = arith.constant dense<0.000000e+00> : vector<1xf32>
    %29 = vector.multi_reduction <add>, %28, %cst_8 [1, 2] : vector<1x24x1xf32> to vector<1xf32>
    %30 = vector.shape_cast %29 : vector<1xf32> to vector<1x1x1xf32>
    %31 = vector.extract %30[0, 0, 0] : f32 from vector<1x1x1xf32>
    %c0_9 = arith.constant 0 : index
    %c0_10 = arith.constant 0 : index
    %32 = memref.load %arg3[%c0_9, %c0_10] : memref<1x1xf32, #tpu.memory_space<smem>>
    memref.store %31, %arg3[%c0_9, %c0_10] : memref<1x1xf32, #tpu.memory_space<smem>>
    return
  }
  func.func @transform_0(%arg0: i32) -> (i32, i32) {
    %c0_i32 = arith.constant 0 : i32
    %c0_i32_0 = arith.constant 0 : i32
    return %arg0, %c0_i32 : i32, i32
  }
  func.func @transform_1(%arg0: i32) -> (i32, i32) {
    %c0_i32 = arith.constant 0 : i32
    %c0_i32_0 = arith.constant 0 : i32
    return %arg0, %c0_i32 : i32, i32
  }
  func.func @transform_2(%arg0: i32) -> (i32, i32) {
    %c0_i32 = arith.constant 0 : i32
    %c0_i32_0 = arith.constant 0 : i32
    return %arg0, %c0_i32 : i32, i32
  }
}

</mosaic_0001>

<llo_original>
// kernel: tpu_custom_call.1
$region0: #{tpu_custom_call.1}
  #allocation0 [shape = 'u32[]', space=smem, size = 0x4, offset = 0x4, fixed_abs, tag = 'smem constant byte address 0x4 - core index']
  #allocation1 [shape = 'u32[144,128]{1,0:T(1,128)}', space=vmem, size = 0x12000, scoped, tag = 'internal scratch']
  %s0 = inlined_call_operand.vmem [shape: f32[20,32], index: 0, kind: input, shape index: {}]
  %s1 = inlined_call_operand.vmem [shape: s32[20,1], index: 1, kind: input, shape index: {}]
  %s2 = inlined_call_operand.hbm [shape: f32[1,1], index: 2, kind: output, shape index: {}]
  %s3 = sld [smem:[#allocation0]]
  $region18: #{tpu_custom_call.1} parent=0
    _
  %s5 = ssub.s32 1, %s3
  %s6 = scalar_select 0, %s5, %s3
  $region1: #{tpu_custom_call.1} parent=0
    #allocation2 [shape = 'u8[512]{0}', space=smem, size = 0x200, scoped, tag = 'output window, operand 0, single buffered']
    #allocation3 [shape = 's32[1]{0}', space=sflag, size = 0x4, scoped, tag = 'scoped memory for tpu_custom_call.1']
    %7 = vsyncpa [#allocation3], 0
    // Predicated region
    $region2: #{tpu_custom_call.1} parent=1 // pred_check
      _
    $region3: #{tpu_custom_call.1} parent=1 // pred_check_branch
      %9 = sbr.rel (0) target = $region5
    $region4: #{tpu_custom_call.1} parent=1 // pred_region
      _
    $region5: #{tpu_custom_call.1} parent=1 // pred_fallthru
      _
    // Predicated region
    $region6: #{tpu_custom_call.1} parent=1 // pred_check
      _
    $region7: #{tpu_custom_call.1} parent=1 // pred_check_branch
      %11 = sbr.rel (0) target = $region9
    $region8: #{tpu_custom_call.1} parent=1 // pred_region
      _
    $region9: #{tpu_custom_call.1} parent=1 // pred_fallthru
      _
    %v12 = vld [vmem:[%s0] sm:$0xff]
    %v13 = vld [vmem:[%s0 + $0x8] sm:$0xff]
    %v14 = vld [vmem:[%s0 + $0x10] sm:$0xff]
    %v15 = vld [vmem:[%s1] sm:$0xff]
    %v16 = vld [vmem:[%s1 + $0x8] sm:$0xff]
    %v17 = vld [vmem:[%s1 + $0x10] sm:$0xff]
    %v18 = vlaneseq
    %v19 = vshrl.u32 %v18, 7
    %v20 = vadd.s32 %v19, 8
    %v21 = vadd.s32 %v19, 16
    %s22 = smul.u32 0, 24
    %v23 = vstv %s22
    %v24 = vadd.s32 %v23, %v19
    %v25 = vadd.s32 %v23, %v20
    %v26 = vadd.s32 %v23, %v21
    %vm27 = vcmp.lt.s32.totalorder %v24, 20
    %vm28 = vcmp.lt.s32.totalorder %v25, 20
    %vm29 = vcmp.lt.s32.totalorder %v26, 20
    %vm30 = vcmp.ne.s32.totalorder %v15, 0
    %vm31 = vcmp.ne.s32.totalorder %v16, 0
    %vm32 = vcmp.ne.s32.totalorder %v17, 0
    %vm33 = vmand %vm27, %vm30
    %vm34 = vmand %vm28, %vm31
    %vm35 = vmand %vm29, %vm32
    %v36 = vlaneseq
    %v37 = vand.u32 %v36, 127
    %38 = vset.pattern.permute.xlu0 0
    %39 = vperm.xlu0 %38, %v15
    %v40 = vpop.permute.xlu0 %39
    %41 = vset.pattern.permute.xlu0 0
    %42 = vperm.xlu0 %41, %v16
    %v43 = vpop.permute.xlu0 %42
    %44 = vset.pattern.permute.xlu0 0
    %45 = vperm.xlu0 %44, %v17
    %v46 = vpop.permute.xlu0 %45
    %vm47 = vcmp.eq.s32.totalorder %v37, %v40
    %vm48 = vcmp.eq.s32.totalorder %v37, %v43
    %vm49 = vcmp.eq.s32.totalorder %v37, %v46
    %v50 = vsel %vm47, -0.6, -0.013333334
    %v51 = vsel %vm48, -0.6, -0.013333334
    %v52 = vsel %vm49, -0.6, -0.013333334
    %v53 = vmul.f32 %v50, %v12
    %v54 = vmul.f32 %v51, %v13
    %v55 = vmul.f32 %v52, %v14
    %vm56 = vcmask 261120
    %v57 = vsel %vm56, %v53, 0.0
    %58 = vadd.xlane.f32.xlu0 %v57
    %v59 = vpop.xlane.xlu0 %58
    %v60 = vsel %vm56, %v54, 0.0
    %61 = vadd.xlane.f32.xlu0 %v60
    %v62 = vpop.xlane.xlu0 %61
    %v63 = vsel %vm56, %v55, 0.0
    %64 = vadd.xlane.f32.xlu0 %v63
    %v65 = vpop.xlane.xlu0 %64
    %v66 = vadd.f32 %v59, -2.0334907
    %v67 = vadd.f32 %v62, -2.0334907
    %v68 = vadd.f32 %v65, -2.0334907
    %v69 = vmul.f32 %v12, 0.013333334
    %v70 = vmul.f32 %v13, 0.013333334
    %v71 = vmul.f32 %v14, 0.013333334
    %v72 = vadd.f32 %v66, %v69
    %v73 = vadd.f32 %v67, %v70
    %v74 = vadd.f32 %v68, %v71
    %v75 = vsel %vm33, %v72, 0.0
    %v76 = vsel %vm34, %v73, 0.0
    %v77 = vsel %vm35, %v74, 0.0
    %vm78 = vcmask 7168
    %v79 = vsel %vm78, %v75, 0.0
    %v80 = vsel %vm78, %v76, 0.0
    %v81 = vadd.f32 %v79, %v80
    %v82 = vsel %vm78, %v77, 0.0
    %v83 = vadd.f32 %v81, %v82
    %84 = vadd.xlane.f32.xlu0 %v83
    %v85 = vpop.xlane.xlu0 %84
    %v86 = vrot.slane %v85, 4
    %v87 = vadd.f32 %v85, %v86
    %v88 = vrot.slane %v87, 2
    %v89 = vadd.f32 %v87, %v88
    %v90 = vrot.slane %v89, 1
    %v91 = vadd.f32 %v89, %v90
    %s92 = vtos %v91
    %s93 = scalar_lea.smem [#allocation2], 0
    %94 = sst [smem:[%s93]] %s92
    // Predicated region
    $region10: #{tpu_custom_call.1} parent=1 // pred_check
      _
    $region11: #{tpu_custom_call.1} parent=1 // pred_check_branch
      %96 = sbr.rel (0) target = $region13
    $region12: #{tpu_custom_call.1} parent=1 // pred_region
      %s98 = ssub.s32 16, 16
      %99 = vsyncadd [#allocation3], %s98
      %102 = dma.smem_to_hbm [#allocation2], 16, %s2, [#allocation3]
    $region13: #{tpu_custom_call.1} parent=1 // pred_fallthru
      _
    // Predicated region
    $region14: #{tpu_custom_call.1} parent=1 // pred_check
      _
    $region15: #{tpu_custom_call.1} parent=1 // pred_check_branch
      %104 = sbr.rel (0) target = $region17
    $region16: #{tpu_custom_call.1} parent=1 // pred_region
      %105 = dma.done [#allocation3], 16
    $region17: #{tpu_custom_call.1} parent=1 // pred_fallthru
      _
    %106 = sfence
    %107 = vsyncpa [#allocation3], 1

</llo_original>
